<compile_context>
chip_gen: v6e
topology: v6e:2x2x1
jax: 0.10.0
libtpu: 0.0.40
codegen_flags: <defaults>
</compile_context>

<pallas_src>
import functools

import jax
import jax.numpy as jnp
from jax import lax
from jax.experimental import pallas as pl
from jax.experimental.pallas import tpu as pltpu

NUM_SAMPLE = 80
_NEG_BIG = -1e30  # segment-mask fill: exp() underflows to exactly 0


def _round_up(v, m):
    return ((v + m - 1) // m) * m


def _choose_row_tile(rows, cap, sub):
    """Row tile: biggest block that fits the cap, but try to expose >=2 grid
    steps (v7x megacore) once there are >= 2*sub rows."""
    r_pad = _round_up(max(rows, 1), sub)
    if r_pad <= cap:
        tile = min(r_pad, _round_up(-(-r_pad // 2), sub))
    else:
        tile = cap
    r_pad = _round_up(r_pad, tile)
    return tile, r_pad


# ----------------------------------------------------------------------------
# Kernel 1: fused x-heads  (agent base logits + 3 opp softmax heads)
# ----------------------------------------------------------------------------
def _fused_heads_kernel(x_ref, w_ref, b_ref, logits_ref, probs_ref, logp_ref,
                        *, n_out, n_opp):
    # Single MXU pass; W is pre-transposed to [K, Npad] (MXU-native), so this
    # is a pure vmatmul with f32 accumulation.
    logits = jnp.dot(x_ref[...], w_ref[...], preferred_element_type=jnp.float32)
    logits = logits + b_ref[...]                       # (1, Npad) broadcast
    logits_ref[...] = logits.astype(logits_ref.dtype)

    # Segmented softmax over the opp-head segments only (cols
    # [n_out, n_out*(1+n_opp))).  Agent-base cols [0, n_out) stay raw logits.
    col = lax.broadcasted_iota(jnp.int32, logits.shape, 1)
    neg = jnp.full_like(logits, _NEG_BIG)
    in_seg = (col >= n_out) & (col < n_out * (1 + n_opp))

    # per-column segment max (one masked lane-reduce per head)
    m_pc = jnp.zeros_like(logits)
    seg_masks = []
    for s in range(n_opp):                             # static, tiny loop
        lo = n_out * (1 + s)
        mask = (col >= lo) & (col < lo + n_out)
        seg_masks.append(mask)
        m_s = jnp.max(jnp.where(mask, logits, neg), axis=-1, keepdims=True)
        m_pc = jnp.where(mask, m_s, m_pc)

    shifted = jnp.where(in_seg, logits - m_pc, neg)
    e = jnp.exp(shifted)                               # exactly 0 outside segments

    d_pc = jnp.ones_like(logits)
    logd_pc = jnp.zeros_like(logits)
    for mask in seg_masks:
        d_s = jnp.sum(jnp.where(mask, e, 0.0), axis=-1, keepdims=True)
        d_pc = jnp.where(mask, d_s, d_pc)
        logd_pc = jnp.where(mask, jnp.log(d_s), logd_pc)

    # exact divide (cheap at these row counts; keeps row sums exact)
    probs_ref[...] = (e / d_pc).astype(probs_ref.dtype)
    logp_ref[...] = jnp.where(in_seg, shifted - logd_pc, neg).astype(logp_ref.dtype)


def fused_x_heads(x, w_t, b, *, n_out, n_opp, tile_cap=512):
    """One pallas_call for all heads that consume x.

    x: [R, K]; w_t: [K, Npad] (pre-packed/transposed); b: [1, Npad].
    Returns (logits, probs, logp), each [R, Npad]:
      cols [0, n_out)                      : agent-base logits (in `logits`)
      cols [n_out*(1+s), n_out*(2+s))      : opp head s (softmaxed in probs/logp)
    """
    R, K = x.shape
    n_pad = w_t.shape[1]
    assert w_t.shape[0] == K and (n_opp + 1) * n_out <= n_pad

    sub = 8 if jnp.dtype(x.dtype).itemsize >= 4 else 16   # bf16 packs 16 sublanes
    tile, r_pad = _choose_row_tile(R, tile_cap, sub)
    x_p = x if r_pad == R else jnp.zeros((r_pad, K), x.dtype).at[:R].set(x)

    kern = functools.partial(_fused_heads_kernel, n_out=n_out, n_opp=n_opp)
    need = 2 * 4 * (tile * K + 3 * tile * n_pad + n_pad * K + n_pad) + (4 << 20)
    vmem = int(min(48 << 20, max(need, 16 << 20)))

    logits, probs, logp = pl.pallas_call(
        kern,
        out_shape=(jax.ShapeDtypeStruct((r_pad, n_pad), jnp.float32),
                   jax.ShapeDtypeStruct((r_pad, n_pad), jnp.float32),
                   jax.ShapeDtypeStruct((r_pad, n_pad), jnp.float32)),
        grid_spec=pltpu.PrefetchScalarGridSpec(
            num_scalar_prefetch=0,
            grid=(r_pad // tile,),
            in_specs=[
                pl.BlockSpec((tile, K), lambda i: (i, 0)),     # rows stream
                pl.BlockSpec((K, n_pad), lambda i: (0, 0)),    # packed W resident
                pl.BlockSpec((1, n_pad), lambda i: (0, 0)),    # packed bias resident
            ],
            out_specs=(
                pl.BlockSpec((tile, n_pad), lambda i: (i, 0)),
                pl.BlockSpec((tile, n_pad), lambda i: (i, 0)),
                pl.BlockSpec((tile, n_pad), lambda i: (i, 0)),
            ),
        ),
        compiler_params=pltpu.CompilerParams(
            dimension_semantics=("parallel",), vmem_limit_bytes=vmem),
    )(x_p, w_t, b)
    return logits[:R], probs[:R], logp[:R]


# ----------------------------------------------------------------------------
# Kernel 2: per-sample agent softmax + probability-weighted mixture
# ----------------------------------------------------------------------------
def _mixture_kernel(base_ref, oh_ref, w_ref, o_ref, *, n_out):
    # logits[b, s, :] = base[b, :] + one_hot_contrib[b, s, :]
    logits = oh_ref[...] + base_ref[...][:, None, :]          # [bt, S, Npad]
    col = lax.broadcasted_iota(jnp.int32, logits.shape, 2)
    logits = jnp.where(col < n_out, logits, _NEG_BIG)          # mask padding lanes
    m = jnp.max(logits, axis=-1, keepdims=True)
    e = jnp.exp(logits - m)
    den = jnp.sum(e, axis=-1, keepdims=True)
    p = e / den                                                # exact per-sample softmax
    out = jnp.sum(p * w_ref[...][:, :, None], axis=1)          # weighted mixture over S
    o_ref[...] = out.astype(o_ref.dtype)


def mixture_weighted_softmax(base_pad, oh_pad, weights, *, n_out, row_cap=32):
    """sum_s weights[b,s] * softmax(base_pad[b,:n_out] + oh_pad[b,s,:n_out]).

    base_pad: [B, Npad] (cols >= n_out are ignored), oh_pad: [B, S, Npad],
    weights: [B, S].  Returns [B, n_out].
    """
    B, n_pad = base_pad.shape
    S = oh_pad.shape[1]
    tile, b_rows = _choose_row_tile(B, row_cap, 8)
    if b_rows != B:
        base_pad = jnp.zeros((b_rows, n_pad), base_pad.dtype).at[:B].set(base_pad)
        oh_pad = jnp.zeros((b_rows, S, n_pad), oh_pad.dtype).at[:B].set(oh_pad)
        weights = jnp.zeros((b_rows, S), weights.dtype).at[:B].set(weights)

    kern = functools.partial(_mixture_kernel, n_out=n_out)
    need = 4 * (2 * (2 * tile * n_pad + tile * S * n_pad + tile * S)
                + 6 * tile * S * n_pad) + (4 << 20)
    vmem = int(min(48 << 20, max(need, 32 << 20)))

    out = pl.pallas_call(
        kern,
        out_shape=jax.ShapeDtypeStruct((b_rows, n_pad), jnp.float32),
        grid_spec=pltpu.PrefetchScalarGridSpec(
            num_scalar_prefetch=0,
            grid=(b_rows // tile,),
            in_specs=[
                pl.BlockSpec((tile, n_pad), lambda i: (i, 0)),
                pl.BlockSpec((tile, S, n_pad), lambda i: (i, 0, 0)),
                pl.BlockSpec((tile, S), lambda i: (i, 0)),
            ],
            out_specs=pl.BlockSpec((tile, n_pad), lambda i: (i, 0)),
        ),
        compiler_params=pltpu.CompilerParams(
            dimension_semantics=("parallel",), vmem_limit_bytes=vmem),
    )(base_pad, oh_pad, weights)
    return out[:B, :n_out]


# ----------------------------------------------------------------------------
# Parameter init (orthogonal, gain=0.01, zero bias), mirroring the torch init_
# ----------------------------------------------------------------------------
def _orthogonal(key, rows, cols, gain):
    a = jax.random.normal(key, (rows, cols), jnp.float32)
    if rows < cols:
        q, r = jnp.linalg.qr(a.T)
        d = jnp.diagonal(r)
        q = q * jnp.where(d == 0, 1.0, jnp.sign(d))[None, :]
        w = q.T
    else:
        q, r = jnp.linalg.qr(a)
        d = jnp.diagonal(r)
        q = q * jnp.where(d == 0, 1.0, jnp.sign(d))[None, :]
        w = q
    return gain * w.astype(jnp.float32)


def init_agent_actor_params(key, num_inputs, num_outputs, opp_agents, gain=0.01):
    keys = jax.random.split(key, opp_agents + 1)
    opp = tuple(
        (_orthogonal(keys[i], num_outputs, num_inputs, gain),
         jnp.zeros((num_outputs,), jnp.float32))
        for i in range(opp_agents))
    agent_w = _orthogonal(keys[-1], num_outputs, num_inputs + opp_agents * 6, gain)
    agent_b = jnp.zeros((num_outputs,), jnp.float32)
    return {"opp": opp, "agent": (agent_w, agent_b)}


def prepare_agent_actor_params(params):
    """Pack / pad / transpose weights ONCE (out of the per-forward path)."""
    opp = params["opp"]
    w_a, b_a = params["agent"]
    n_opp = len(opp)
    n_out = w_a.shape[0]
    k_x = opp[0][0].shape[1]

    # Packed x-heads: [agent_base | opp_0 | ... | opp_{n-1}] -> pad -> transpose.
    w_stack = jnp.concatenate([w_a[:, :k_x]] + [w for (w, _) in opp], axis=0)
    b_stack = jnp.concatenate([b_a] + [b for (_, b) in opp], axis=0)
    n_real = (n_opp + 1) * n_out
    n_pad = _round_up(n_real, 128)
    w_pad = jnp.zeros((n_pad, k_x), jnp.float32).at[:n_real].set(w_stack)
    w_t = jnp.asarray(w_pad.T)                                 # [K, Npad] MXU-native
    b_pad = jnp.zeros((1, n_pad), jnp.float32).at[0, :n_real].set(b_stack)

    # One-hot part of the agent weight, transposed and lane-padded once, so
    # the per-sample contribution is a plain row gather.
    w_oh = w_a[:, k_x:]                                        # [n_out, n_opp*6]
    w_oh_t = jnp.zeros((w_oh.shape[1], n_pad), jnp.float32).at[:, :n_out].set(w_oh.T)
    return {"w_t": w_t, "b": b_pad, "w_oh_t": w_oh_t}


# ----------------------------------------------------------------------------
# Agent_Actor.forward
# ----------------------------------------------------------------------------
def agent_actor_forward(prep, x, key, *, n_opp, n_out, num_sample=NUM_SAMPLE):
    """Returns (actions_probs [B, n_out], evl_oppaction_prob list, mean entropy)."""
    logits, probs, logp = fused_x_heads(x, prep["w_t"], prep["b"],
                                        n_out=n_out, n_opp=n_opp)
    base_pad = logits                         # agent-base logits live in cols [0, n_out)

    opp_dists, entropies, opp_actions, opp_action_probs = [], [], [], []
    keys = jax.random.split(key, n_opp)
    for s in range(n_opp):
        lo = n_out * (1 + s)
        p_s = probs[:, lo:lo + n_out]
        lp_s = logp[:, lo:lo + n_out]
        opp_dists.append(p_s)
        entropies.append(-jnp.mean(jnp.sum(p_s * lp_s, axis=-1)))   # NaN-safe
        # TODO(synk): categorical sampling / gather glue stays in plain JAX
        # (tiny, data-dependent, random); no in-kernel PRNG sampling.
        acts = jax.random.categorical(keys[s], lp_s, shape=(num_sample, x.shape[0]))
        acts = acts.T.astype(jnp.int32)                             # [B, S]
        opp_actions.append(acts)
        opp_action_probs.append(jnp.take_along_axis(p_s, acts, axis=1))

    probs1 = opp_action_probs[0]
    for p in opp_action_probs[1:]:
        probs1 = probs1 * p
    probs2 = probs1 / jnp.sum(probs1, axis=1, keepdims=True)        # [B, S]

    # One-hot decomposition of the agent head: gather + sum the W_oh columns
    # selected by the sampled actions (replaces x_rep / one_hot / concat / a2d).
    actions3 = jnp.stack(opp_actions, axis=-1)                      # [B, S, n_opp]
    oh_width = prep["w_oh_t"].shape[0] // n_opp
    flat_idx = actions3 + jnp.arange(n_opp, dtype=jnp.int32) * oh_width
    oh_contrib = jnp.take(prep["w_oh_t"], flat_idx, axis=0).sum(axis=2)   # [B, S, Npad]

    actions_probs = mixture_weighted_softmax(base_pad, oh_contrib, probs2, n_out=n_out)
    mean_entropy = sum(entropies) / n_opp
    return actions_probs, opp_dists, mean_entropy


if __name__ == "__main__":
    key = jax.random.PRNGKey(0)
    k_x, k_p, k_s, k_a, k_w2 = jax.random.split(key, 5)

    B, num_inputs, num_outputs, opp_agents = 8, 32, 6, 3
    x = jax.random.normal(k_x, (B, num_inputs), jnp.float32)
    params = init_agent_actor_params(k_p, num_inputs, num_outputs, opp_agents)
    prep = prepare_agent_actor_params(params)
    w_a, b_a = params["agent"]

    # --- check 1: fused kernel vs pure-JAX reference (deterministic part) ---
    logits_o, probs_o, logp_o = fused_x_heads(x, prep["w_t"], prep["b"],
                                              n_out=num_outputs, n_opp=opp_agents)
    base_ref = x @ w_a[:, :num_inputs].T + b_a
    assert jnp.allclose(logits_o[:, :num_outputs], base_ref, atol=2e-3, rtol=2e-3)
    for s, (w, b) in enumerate(params["opp"]):
        ref = jax.nn.softmax(x @ w.T + b, axis=-1)
        lo = num_outputs * (1 + s)
        assert jnp.allclose(probs_o[:, lo:lo + num_outputs], ref, atol=2e-3, rtol=2e-3)
        assert jnp.allclose(logp_o[:, lo:lo + num_outputs], jnp.log(ref),
                            atol=2e-3, rtol=2e-3)

    # --- check 2: one-hot decomposition + mixture kernel vs full-concat ref --
    acts_test = jax.random.randint(k_a, (B, NUM_SAMPLE, opp_agents), 0,
                                   num_outputs, dtype=jnp.int32)
    w2_test = jax.nn.softmax(jax.random.normal(k_w2, (B, NUM_SAMPLE)), axis=-1)
    onehot = jax.nn.one_hot(acts_test, 6, dtype=jnp.float32).reshape(
        B, NUM_SAMPLE, opp_agents * 6)
    x_rep = jnp.broadcast_to(x[:, None, :], (B, NUM_SAMPLE, num_inputs))
    a_full = jnp.concatenate([x_rep, onehot], axis=-1)
    ref_mix = jnp.einsum("bs,bsn->bn", w2_test,
                         jax.nn.softmax(a_full @ w_a.T + b_a, axis=-1))
    flat_idx = acts_test + jnp.arange(opp_agents, dtype=jnp.int32) * 6
    oh_contrib = jnp.take(prep["w_oh_t"], flat_idx, axis=0).sum(axis=2)
    got_mix = mixture_weighted_softmax(logits_o, oh_contrib, w2_test, n_out=num_outputs)
    assert jnp.allclose(got_mix, ref_mix, atol=2e-3, rtol=2e-3)

    # --- full Agent_Actor forward --------------------------------------------
    fwd = jax.jit(functools.partial(agent_actor_forward, n_opp=opp_agents,
                                    n_out=num_outputs, num_sample=NUM_SAMPLE))
    actions_probs, opp_dists, mean_entropy = fwd(prep, x, k_s)
    actions_probs = jax.block_until_ready(actions_probs)

    assert actions_probs.shape == (B, num_outputs)
    assert len(opp_dists) == opp_agents
    assert all(d.shape == (B, num_outputs) for d in opp_dists)
    assert jnp.all(jnp.isfinite(actions_probs))
    # weighted mixture of softmaxes -> each row still sums to ~1
    assert jnp.allclose(jnp.sum(actions_probs, axis=-1), jnp.ones((B,)), atol=5e-3)
    ent_ref = sum(-jnp.mean(jnp.sum(d * jnp.log(d), axis=-1))
                  for d in (jax.nn.softmax(x @ w.T + b, axis=-1)
                            for (w, b) in params["opp"])) / opp_agents
    assert bool(jnp.isfinite(mean_entropy))
    assert jnp.allclose(mean_entropy, ent_ref, atol=2e-3)

    print("KERNEL_OK")
</pallas_src>

<mosaic_0001>
module attributes {stable_mosaic.version = 11 : i64} {
  func.func @_fused_heads_kernel(%arg0: i32, %arg1: memref<8x32xf32, #tpu.memory_space<vmem>>, %arg2: memref<32x128xf32, #tpu.memory_space<vmem>>, %arg3: memref<1x128xf32, #tpu.memory_space<vmem>>, %arg4: memref<8x128xf32, #tpu.memory_space<vmem>>, %arg5: memref<8x128xf32, #tpu.memory_space<vmem>>, %arg6: memref<8x128xf32, #tpu.memory_space<vmem>>) attributes {dimension_semantics = [#tpu.dimension_semantics<parallel>], iteration_bounds = array<i64: 1>, scalar_prefetch = 0 : i64, scratch_operands = 0 : i64, tpu.core_type = #tpu.core_type<tc>, window_params = [{transform_indices = @transform_0, window_bounds = array<i64: 8, 32>}, {pipeline_mode = #tpu.pipeline_mode<synchronous>, transform_indices = @transform_1, window_bounds = array<i64: 32, 128>}, {pipeline_mode = #tpu.pipeline_mode<synchronous>, transform_indices = @transform_2, window_bounds = array<i64: 1, 128>}, {transform_indices = @transform_3, window_bounds = array<i64: 8, 128>}, {transform_indices = @transform_4, window_bounds = array<i64: 8, 128>}, {transform_indices = @transform_5, window_bounds = array<i64: 8, 128>}]} {
    %c0 = arith.constant 0 : index
    %c0_0 = arith.constant 0 : index
    %0 = vector.load %arg1[%c0, %c0_0] : memref<8x32xf32, #tpu.memory_space<vmem>>, vector<8x32xf32>
    %c0_1 = arith.constant 0 : index
    %c0_2 = arith.constant 0 : index
    %1 = vector.load %arg2[%c0_1, %c0_2] : memref<32x128xf32, #tpu.memory_space<vmem>>, vector<32x128xf32>
    %cst = arith.constant dense<0.000000e+00> : vector<8x128xf32>
    %2 = tpu.matmul %0, %1, %cst {dimension_numbers = #tpu.dot_dimension_numbers<[1], [0], [0], [1], [0, 0, 1, 1], [], []>} : vector<8x32xf32>, vector<32x128xf32>, vector<8x128xf32> -> vector<8x128xf32>
    %c0_3 = arith.constant 0 : index
    %c0_4 = arith.constant 0 : index
    %3 = vector.load %arg3[%c0_3, %c0_4] : memref<1x128xf32, #tpu.memory_space<vmem>>, vector<1x128xf32>
    %4 = vector.broadcast %3 : vector<1x128xf32> to vector<8x128xf32>
    %5 = arith.addf %2, %4 : vector<8x128xf32>
    %c0_5 = arith.constant 0 : index
    %c0_6 = arith.constant 0 : index
    %6 = vector.load %arg4[%c0_5, %c0_6] : memref<8x128xf32, #tpu.memory_space<vmem>>, vector<8x128xf32>
    tpu.vector_store %arg4[%c0_5, %c0_6], %5 {strides = array<i32>} : memref<8x128xf32, #tpu.memory_space<vmem>>, vector<8x128xf32>,
    %7 = tpu.iota {dimensions = array<i32: 1>} : vector<8x128xi32>
    %cst_7 = arith.constant -1.000000e+30 : f32
    %8 = vector.broadcast %cst_7 : f32 to vector<8x128xf32>
    %c6_i32 = arith.constant 6 : i32
    %9 = vector.broadcast %c6_i32 : i32 to vector<8x128xi32>
    %10 = arith.cmpi sge, %7, %9 : vector<8x128xi32>
    %c24_i32 = arith.constant 24 : i32
    %11 = vector.broadcast %c24_i32 : i32 to vector<8x128xi32>
    %12 = arith.cmpi slt, %7, %11 : vector<8x128xi32>
    %13 = arith.andi %10, %12 : vector<8x128xi1>
    %cst_8 = arith.constant 0.000000e+00 : f32
    %14 = vector.broadcast %cst_8 : f32 to vector<8x128xf32>
    %c6_i32_9 = arith.constant 6 : i32
    %15 = vector.broadcast %c6_i32_9 : i32 to vector<8x128xi32>
    %16 = arith.cmpi sge, %7, %15 : vector<8x128xi32>
    %c12_i32 = arith.constant 12 : i32
    %17 = vector.broadcast %c12_i32 : i32 to vector<8x128xi32>
    %18 = arith.cmpi slt, %7, %17 : vector<8x128xi32>
    %19 = arith.andi %16, %18 : vector<8x128xi1>
    %20 = arith.select %19, %5, %8 : vector<8x128xi1>, vector<8x128xf32>
    %cst_10 = arith.constant dense<0xFF800000> : vector<8xf32>
    %21 = vector.multi_reduction <maximumf>, %20, %cst_10 [1] : vector<8x128xf32> to vector<8xf32>
    %22 = vector.shape_cast %21 : vector<8xf32> to vector<8x1xf32>
    %23 = vector.shape_cast %22 : vector<8x1xf32> to vector<8x1xf32>
    %24 = vector.broadcast %23 : vector<8x1xf32> to vector<8x128xf32>
    %25 = arith.select %19, %24, %14 : vector<8x128xi1>, vector<8x128xf32>
    %c12_i32_11 = arith.constant 12 : i32
    %26 = vector.broadcast %c12_i32_11 : i32 to vector<8x128xi32>
    %27 = arith.cmpi sge, %7, %26 : vector<8x128xi32>
    %c18_i32 = arith.constant 18 : i32
    %28 = vector.broadcast %c18_i32 : i32 to vector<8x128xi32>
    %29 = arith.cmpi slt, %7, %28 : vector<8x128xi32>
    %30 = arith.andi %27, %29 : vector<8x128xi1>
    %31 = arith.select %30, %5, %8 : vector<8x128xi1>, vector<8x128xf32>
    %cst_12 = arith.constant dense<0xFF800000> : vector<8xf32>
    %32 = vector.multi_reduction <maximumf>, %31, %cst_12 [1] : vector<8x128xf32> to vector<8xf32>
    %33 = vector.shape_cast %32 : vector<8xf32> to vector<8x1xf32>
    %34 = vector.shape_cast %33 : vector<8x1xf32> to vector<8x1xf32>
    %35 = vector.broadcast %34 : vector<8x1xf32> to vector<8x128xf32>
    %36 = arith.select %30, %35, %25 : vector<8x128xi1>, vector<8x128xf32>
    %c18_i32_13 = arith.constant 18 : i32
    %37 = vector.broadcast %c18_i32_13 : i32 to vector<8x128xi32>
    %38 = arith.cmpi sge, %7, %37 : vector<8x128xi32>
    %c24_i32_14 = arith.constant 24 : i32
    %39 = vector.broadcast %c24_i32_14 : i32 to vector<8x128xi32>
    %40 = arith.cmpi slt, %7, %39 : vector<8x128xi32>
    %41 = arith.andi %38, %40 : vector<8x128xi1>
    %42 = arith.select %41, %5, %8 : vector<8x128xi1>, vector<8x128xf32>
    %cst_15 = arith.constant dense<0xFF800000> : vector<8xf32>
    %43 = vector.multi_reduction <maximumf>, %42, %cst_15 [1] : vector<8x128xf32> to vector<8xf32>
    %44 = vector.shape_cast %43 : vector<8xf32> to vector<8x1xf32>
    %45 = vector.shape_cast %44 : vector<8x1xf32> to vector<8x1xf32>
    %46 = vector.broadcast %45 : vector<8x1xf32> to vector<8x128xf32>
    %47 = arith.select %41, %46, %36 : vector<8x128xi1>, vector<8x128xf32>
    %48 = arith.subf %5, %47 : vector<8x128xf32>
    %49 = arith.select %13, %48, %8 : vector<8x128xi1>, vector<8x128xf32>
    %50 = math.exp %49 : vector<8x128xf32>
    %cst_16 = arith.constant 1.000000e+00 : f32
    %51 = vector.broadcast %cst_16 : f32 to vector<8x128xf32>
    %cst_17 = arith.constant 0.000000e+00 : f32
    %52 = vector.broadcast %cst_17 : f32 to vector<8x128xf32>
    %cst_18 = arith.constant 0.000000e+00 : f32
    %53 = vector.broadcast %cst_18 : f32 to vector<8x128xf32>
    %54 = arith.select %19, %50, %53 : vector<8x128xi1>, vector<8x128xf32>
    %cst_19 = arith.constant dense<0.000000e+00> : vector<8xf32>
    %55 = vector.multi_reduction <add>, %54, %cst_19 [1] : vector<8x128xf32> to vector<8xf32>
    %56 = vector.shape_cast %55 : vector<8xf32> to vector<8x1xf32>
    %57 = vector.shape_cast %56 : vector<8x1xf32> to vector<8x1xf32>
    %58 = vector.broadcast %57 : vector<8x1xf32> to vector<8x128xf32>
    %59 = arith.select %19, %58, %51 : vector<8x128xi1>, vector<8x128xf32>
    %60 = math.log %56 : vector<8x1xf32>
    %61 = vector.shape_cast %60 : vector<8x1xf32> to vector<8x1xf32>
    %62 = vector.broadcast %61 : vector<8x1xf32> to vector<8x128xf32>
    %63 = arith.select %19, %62, %52 : vector<8x128xi1>, vector<8x128xf32>
    %cst_20 = arith.constant 0.000000e+00 : f32
    %64 = vector.broadcast %cst_20 : f32 to vector<8x128xf32>
    %65 = arith.select %30, %50, %64 : vector<8x128xi1>, vector<8x128xf32>
    %cst_21 = arith.constant dense<0.000000e+00> : vector<8xf32>
    %66 = vector.multi_reduction <add>, %65, %cst_21 [1] : vector<8x128xf32> to vector<8xf32>
    %67 = vector.shape_cast %66 : vector<8xf32> to vector<8x1xf32>
    %68 = vector.shape_cast %67 : vector<8x1xf32> to vector<8x1xf32>
    %69 = vector.broadcast %68 : vector<8x1xf32> to vector<8x128xf32>
    %70 = arith.select %30, %69, %59 : vector<8x128xi1>, vector<8x128xf32>
    %71 = math.log %67 : vector<8x1xf32>
    %72 = vector.shape_cast %71 : vector<8x1xf32> to vector<8x1xf32>
    %73 = vector.broadcast %72 : vector<8x1xf32> to vector<8x128xf32>
    %74 = arith.select %30, %73, %63 : vector<8x128xi1>, vector<8x128xf32>
    %cst_22 = arith.constant 0.000000e+00 : f32
    %75 = vector.broadcast %cst_22 : f32 to vector<8x128xf32>
    %76 = arith.select %41, %50, %75 : vector<8x128xi1>, vector<8x128xf32>
    %cst_23 = arith.constant dense<0.000000e+00> : vector<8xf32>
    %77 = vector.multi_reduction <add>, %76, %cst_23 [1] : vector<8x128xf32> to vector<8xf32>
    %78 = vector.shape_cast %77 : vector<8xf32> to vector<8x1xf32>
    %79 = vector.shape_cast %78 : vector<8x1xf32> to vector<8x1xf32>
    %80 = vector.broadcast %79 : vector<8x1xf32> to vector<8x128xf32>
    %81 = arith.select %41, %80, %70 : vector<8x128xi1>, vector<8x128xf32>
    %82 = math.log %78 : vector<8x1xf32>
    %83 = vector.shape_cast %82 : vector<8x1xf32> to vector<8x1xf32>
    %84 = vector.broadcast %83 : vector<8x1xf32> to vector<8x128xf32>
    %85 = arith.select %41, %84, %74 : vector<8x128xi1>, vector<8x128xf32>
    %86 = arith.divf %50, %81 : vector<8x128xf32>
    %c0_24 = arith.constant 0 : index
    %c0_25 = arith.constant 0 : index
    %87 = vector.load %arg5[%c0_24, %c0_25] : memref<8x128xf32, #tpu.memory_space<vmem>>, vector<8x128xf32>
    tpu.vector_store %arg5[%c0_24, %c0_25], %86 {strides = array<i32>} : memref<8x128xf32, #tpu.memory_space<vmem>>, vector<8x128xf32>,
    %88 = arith.subf %49, %85 : vector<8x128xf32>
    %89 = arith.select %13, %88, %8 : vector<8x128xi1>, vector<8x128xf32>
    %c0_26 = arith.constant 0 : index
    %c0_27 = arith.constant 0 : index
    %90 = vector.load %arg6[%c0_26, %c0_27] : memref<8x128xf32, #tpu.memory_space<vmem>>, vector<8x128xf32>
    tpu.vector_store %arg6[%c0_26, %c0_27], %89 {strides = array<i32>} : memref<8x128xf32, #tpu.memory_space<vmem>>, vector<8x128xf32>,
    return
  }
  func.func @transform_0(%arg0: i32) -> (i32, i32) {
    %c0_i32 = arith.constant 0 : i32
    %c0_i32_0 = arith.constant 0 : i32
    return %arg0, %c0_i32 : i32, i32
  }
  func.func @transform_1(%arg0: i32) -> (i32, i32) {
    %c0_i32 = arith.constant 0 : i32
    %c0_i32_0 = arith.constant 0 : i32
    %c0_i32_1 = arith.constant 0 : i32
    return %c0_i32, %c0_i32_0 : i32, i32
  }
  func.func @transform_2(%arg0: i32) -> (i32, i32) {
    %c0_i32 = arith.constant 0 : i32
    %c0_i32_0 = arith.constant 0 : i32
    %c0_i32_1 = arith.constant 0 : i32
    return %c0_i32, %c0_i32_0 : i32, i32
  }
  func.func @transform_3(%arg0: i32) -> (i32, i32) {
    %c0_i32 = arith.constant 0 : i32
    %c0_i32_0 = arith.constant 0 : i32
    return %arg0, %c0_i32 : i32, i32
  }
  func.func @transform_4(%arg0: i32) -> (i32, i32) {
    %c0_i32 = arith.constant 0 : i32
    %c0_i32_0 = arith.constant 0 : i32
    return %arg0, %c0_i32 : i32, i32
  }
  func.func @transform_5(%arg0: i32) -> (i32, i32) {
    %c0_i32 = arith.constant 0 : i32
    %c0_i32_0 = arith.constant 0 : i32
    return %arg0, %c0_i32 : i32, i32
  }
}

</mosaic_0001>

<llo_original>
// kernel: tpu_custom_call.1
$region0: #{tpu_custom_call.1}
  #allocation0 [shape = 'u32[]', space=smem, size = 0x4, offset = 0x4, fixed_abs, tag = 'smem constant byte address 0x4 - core index']
  #allocation1 [shape = 'u32[144,128]{1,0:T(1,128)}', space=vmem, size = 0x12000, scoped, tag = 'internal scratch']
  %s0 = inlined_call_operand.hbm [shape: f32[8,32], index: 0, kind: input, shape index: {}]
  %s1 = inlined_call_operand.hbm [shape: f32[32,128], index: 1, kind: input, shape index: {}]
  %s2 = inlined_call_operand.vmem [shape: f32[1,128], index: 2, kind: input, shape index: {}]
  %s3 = inlined_call_operand.hbm [shape: f32[8,128], index: 3, kind: output, shape index: {0}]
  %s4 = inlined_call_operand.hbm [shape: f32[8,128], index: 4, kind: output, shape index: {1}]
  %s5 = inlined_call_operand.hbm [shape: f32[8,128], index: 5, kind: output, shape index: {2}]
  %6 = xla_tuple %s3, %s4, %s5
  %s7 = sld [smem:[#allocation0]]
  $region46: #{tpu_custom_call.1} parent=0
    _
  %s9 = ssub.s32 1, %s7
  %s10 = scalar_select 0, %s9, %s7
  $region1: #{tpu_custom_call.1} parent=0
    #allocation2 [shape = 'u8[4096]{0}', space=vmem, size = 0x1000, scoped, tag = 'input window, operand 0, single buffered']
    #allocation3 [shape = 's32[1]{0}', space=sflag, size = 0x4, scoped, tag = 'scoped memory for tpu_custom_call.1']
    #allocation4 [shape = 's32[1]{0}', space=sflag, size = 0x4, scoped, tag = 'scoped memory for tpu_custom_call.1']
    #allocation5 [shape = 'u8[16384]{0}', space=vmem, size = 0x4000, scoped, tag = 'input window, operand 1, single buffered']
    #allocation6 [shape = 's32[1]{0}', space=sflag, size = 0x4, scoped, tag = 'scoped memory for tpu_custom_call.1']
    #allocation7 [shape = 'u8[4096]{0}', space=vmem, size = 0x1000, scoped, tag = 'output window, operand 0, single buffered']
    #allocation8 [shape = 'u8[4096]{0}', space=vmem, size = 0x1000, scoped, tag = 'output window, operand 1, single buffered']
    #allocation9 [shape = 's32[1]{0}', space=sflag, size = 0x4, scoped, tag = 'scoped memory for tpu_custom_call.1']
    #allocation10 [shape = 'u8[4096]{0}', space=vmem, size = 0x1000, scoped, tag = 'output window, operand 2, single buffered']
    %11 = vsyncpa [#allocation3], 0
    %12 = vsyncpa [#allocation6], 0
    %13 = vsyncpa [#allocation4], 0
    %14 = vsyncpa [#allocation9], 0
    // Predicated region
    $region2: #{tpu_custom_call.1} parent=1 // pred_check
      _
    $region3: #{tpu_custom_call.1} parent=1 // pred_check_branch
      %16 = sbr.rel (0) target = $region5
    $region4: #{tpu_custom_call.1} parent=1 // pred_region
      %s18 = ssub.s32 128, 128
      %19 = vsyncadd [#allocation3], %s18
      %s21 = sshll.u32 [#allocation2], 4
      %s22 = int_to_ptr.vmem [resolvable:$true] %s21
      %24 = dma.hbm_to_vmem [thread:$0]  %s0, 128, %s22, [#allocation3]
    $region5: #{tpu_custom_call.1} parent=1 // pred_fallthru
      _
    // Predicated region
    $region6: #{tpu_custom_call.1} parent=1 // pred_check
      _
    $region7: #{tpu_custom_call.1} parent=1 // pred_check_branch
      %26 = sbr.rel (0) target = $region9
    $region8: #{tpu_custom_call.1} parent=1 // pred_region
      %s28 = ssub.s32 512, 512
      %29 = vsyncadd [#allocation6], %s28
      %s30 = sshll.u32 [#allocation5], 4
      %s31 = int_to_ptr.vmem [resolvable:$true] %s30
      %36 = dma.hbm_to_vmem [thread:$0]  %s1, 512, %s31, [#allocation6], 128, 128, 8
    $region9: #{tpu_custom_call.1} parent=1 // pred_fallthru
      _
    // Predicated region
    $region10: #{tpu_custom_call.1} parent=1 // pred_check
      _
    $region11: #{tpu_custom_call.1} parent=1 // pred_check_branch
      %38 = sbr.rel (0) target = $region13
    $region12: #{tpu_custom_call.1} parent=1 // pred_region
      _
    $region13: #{tpu_custom_call.1} parent=1 // pred_fallthru
      _
    // Predicated region
    $region14: #{tpu_custom_call.1} parent=1 // pred_check
      _
    $region15: #{tpu_custom_call.1} parent=1 // pred_check_branch
      %40 = sbr.rel (0) target = $region17
    $region16: #{tpu_custom_call.1} parent=1 // pred_region
      %41 = dma.done [#allocation3], 128
    $region17: #{tpu_custom_call.1} parent=1 // pred_fallthru
      _
    // Predicated region
    $region18: #{tpu_custom_call.1} parent=1 // pred_check
      _
    $region19: #{tpu_custom_call.1} parent=1 // pred_check_branch
      %43 = sbr.rel (0) target = $region21
    $region20: #{tpu_custom_call.1} parent=1 // pred_region
      %44 = dma.done [#allocation6], 512
    $region21: #{tpu_custom_call.1} parent=1 // pred_fallthru
      _
    %v45 = vld [vmem:[#allocation2] sm:$0xff]
    %v46 = vld [vmem:[#allocation5] sm:$0xff]
    %v47 = vld [vmem:[#allocation5 + $0x8] sm:$0xff]
    %v48 = vld [vmem:[#allocation5 + $0x10] sm:$0xff]
    %v49 = vld [vmem:[#allocation5 + $0x18] sm:$0xff]
    %v50 = vld [vmem:[%s2] sm:$0x1]
    %v52 = vlaneseq
    %v53 = vshrl.u32 %v52, 7
    %v54 = vsub.s32 0, %v53
    %v55 = vrot.slane %v50, %v54
    %vm57 = vcmask 261120
    %v59 = vsel %vm57, %v45, 0
    %61 = vmatprep.subr.mxu0 0.0
    %62 = vmatpush1.msra.mxu0 0.0
    %63 = vmatprep.subr.mxu0 0.0
    %64 = vmatpush1.msra.mxu0 0.0
    %65 = vmatprep.subr.mxu0 0.0
    %66 = vmatpush1.msra.mxu0 0.0
    %67 = vmatprep.subr.mxu0 0.0
    %68 = vmatpush1.msra.mxu0 0.0
    %69 = vmatprep.subr.mxu0 0.0
    %70 = vmatpush1.msra.mxu0 0.0
    %71 = vmatprep.subr.mxu0 0.0
    %72 = vmatpush1.msra.mxu0 0.0
    %73 = vmatprep.subr.mxu0 0.0
    %74 = vmatpush1.msra.mxu0 0.0
    %75 = vmatprep.subr.mxu0 0.0
    %76 = vmatpush1.msra.mxu0 0.0
    %77 = vmatprep.subr.mxu0 0.0
    %78 = vmatpush1.msra.mxu0 0.0
    %79 = vmatprep.subr.mxu0 0.0
    %80 = vmatpush1.msra.mxu0 0.0
    %81 = vmatprep.subr.mxu0 0.0
    %82 = vmatpush1.msra.mxu0 0.0
    %83 = vmatprep.subr.mxu0 0.0
    %84 = vmatpush1.msra.mxu0 0.0
    %85 = vmatprep.subr.mxu0 0.0
    %86 = vmatpush1.msra.mxu0 %v49
    %87 = vmatprep.subr.mxu0 0.0
    %88 = vmatpush1.msra.mxu0 %v48
    %89 = vmatprep.subr.mxu0 0.0
    %90 = vmatpush1.msra.mxu0 %v47
    %91 = vmatprep.subr.mxu0 0.0
    %92 = vmatpush1.msra.mxu0 %v46
    %93 = vmatprep.subr.mxu0 0.0
    %94 = vmatpush2.msra.mxu0 0.0
    %95 = vmatprep.subr.mxu0 0.0
    %96 = vmatpush2.msra.mxu0 0.0
    %97 = vmatprep.subr.mxu0 0.0
    %98 = vmatpush2.msra.mxu0 0.0
    %99 = vmatprep.subr.mxu0 0.0
    %100 = vmatpush2.msra.mxu0 0.0
    %101 = vmatprep.subr.mxu0 0.0
    %102 = vmatpush2.msra.mxu0 0.0
    %103 = vmatprep.subr.mxu0 0.0
    %104 = vmatpush2.msra.mxu0 0.0
    %105 = vmatprep.subr.mxu0 0.0
    %106 = vmatpush2.msra.mxu0 0.0
    %107 = vmatprep.subr.mxu0 0.0
    %108 = vmatpush2.msra.mxu0 0.0
    %109 = vmatprep.subr.mxu0 0.0
    %110 = vmatpush2.msra.mxu0 0.0
    %111 = vmatprep.subr.mxu0 0.0
    %112 = vmatpush2.msra.mxu0 0.0
    %113 = vmatprep.subr.mxu0 0.0
    %114 = vmatpush2.msra.mxu0 0.0
    %115 = vmatprep.subr.mxu0 0.0
    %116 = vmatpush2.msra.mxu0 0.0
    %117 = vmatprep.subr.mxu0 0.0
    %118 = vmatpush2.msra.mxu0 0.0
    %119 = vmatprep.subr.mxu0 0.0
    %120 = vmatpush2.msra.mxu0 0.0
    %121 = vmatprep.subr.mxu0 0.0
    %122 = vmatpush2.msra.mxu0 0.0
    %123 = vmatprep.subr.mxu0 0.0
    %124 = vmatpush2.msra.mxu0 0.0
    %125 = vmatprep.mubr.f32.mxu0 0.0
    %126 = vmatmul.mubr.f32.gmra.mxu0 %v59
    %v127 = vpop.f32.mrf.mxu0
    %v128 = vadd.f32 %v55, %v127
    %v129 = vpop.f32.mrf.mxu0
    %130 = vdwg.mxu0
    %131 = vst [vmem:[#allocation7] sm:$0xff] %v128
    %v132 = vlaneseq
    %v133 = vand.u32 %v132, 127
    %vm134 = vcmp.ge.s32.totalorder %v133, 6
    %vm135 = vcmp.lt.s32.totalorder %v133, 24
    %vm136 = vmand %vm134, %vm135
    %vm137 = vcmp.lt.s32.totalorder %v133, 12
    %vm138 = vmand %vm134, %vm137
    %v139 = vsel %vm138, %v128, -1e+30
    %140 = vmax.xlane.f32.xlu0 %v139
    %v141 = vpop.xlane.xlu0 %140
    %v142 = vsel %vm138, %v141, 0.0
    %vm143 = vcmp.ge.s32.totalorder %v133, 12
    %vm144 = vcmp.lt.s32.totalorder %v133, 18
    %vm145 = vmand %vm143, %vm144
    %v146 = vsel %vm145, %v128, -1e+30
    %147 = vmax.xlane.f32.xlu0 %v146
    %v148 = vpop.xlane.xlu0 %147
    %v149 = vsel %vm145, %v148, %v142
    %vm150 = vcmp.ge.s32.totalorder %v133, 18
    %vm151 = vmand %vm150, %vm135
    %v152 = vsel %vm151, %v128, -1e+30
    %153 = vmax.xlane.f32.xlu0 %v152
    %v154 = vpop.xlane.xlu0 %153
    %v155 = vsel %vm151, %v154, %v149
    %v156 = vsub.f32 %v128, %v155
    %v157 = vsel %vm136, %v156, -1e+30
    %v158 = vmul.f32 %v157, 1.442695
    %v159 = vpow.pop %v158
    %v160 = vsel %vm138, %v159, 0.0
    %161 = vadd.xlane.f32.xlu0 %v160
    %v162 = vpop.xlane.xlu0 %161
    %v163 = vsel %vm138, %v162, 1.0
    %v164 = vlog2.pop %v162
    %v165 = vmul.f32 %v164, 0.6931472
    %v166 = vsel %vm138, %v165, 0.0
    %v167 = vsel %vm145, %v159, 0.0
    %168 = vadd.xlane.f32.xlu0 %v167
    %v169 = vpop.xlane.xlu0 %168
    %v170 = vsel %vm145, %v169, %v163
    %v171 = vlog2.pop %v169
    %v172 = vmul.f32 %v171, 0.6931472
    %v173 = vsel %vm145, %v172, %v166
    %v174 = vsel %vm151, %v159, 0.0
    %175 = vadd.xlane.f32.xlu0 %v174
    %v176 = vpop.xlane.xlu0 %175
    %v177 = vsel %vm151, %v176, %v170
    %v178 = vlog2.pop %v176
    %v179 = vmul.f32 %v178, 0.6931472
    %v180 = vsel %vm151, %v179, %v173
    %v181 = vrcp.pop %v177
    %v182 = vmul.f32 %v159, %v181
    %183 = vst [vmem:[#allocation8] sm:$0xff] %v182
    %v184 = vsub.f32 %v157, %v180
    %v185 = vsel %vm136, %v184, -1e+30
    %186 = vst [vmem:[#allocation10] sm:$0xff] %v185
    // Predicated region
    $region22: #{tpu_custom_call.1} parent=1 // pred_check
      _
    $region23: #{tpu_custom_call.1} parent=1 // pred_check_branch
      %188 = sbr.rel (0) target = $region25
    $region24: #{tpu_custom_call.1} parent=1 // pred_region
      %s190 = ssub.s32 128, 128
      %191 = vsyncadd [#allocation4], %s190
      %s193 = sshll.u32 [#allocation7], 4
      %s194 = int_to_ptr.vmem [resolvable:$true] %s193
      %196 = dma.vmem_to_hbm [thread:$0]  %s194, 128, %s3, [#allocation4]
    $region25: #{tpu_custom_call.1} parent=1 // pred_fallthru
      _
    // Predicated region
    $region26: #{tpu_custom_call.1} parent=1 // pred_check
      _
    $region27: #{tpu_custom_call.1} parent=1 // pred_check_branch
      %198 = sbr.rel (0) target = $region29
    $region28: #{tpu_custom_call.1} parent=1 // pred_region
      %s200 = ssub.s32 128, 128
      %201 = vsyncadd [#allocation9], %s200
      %s203 = sshll.u32 [#allocation8], 4
      %s204 = int_to_ptr.vmem [resolvable:$true] %s203
      %206 = dma.vmem_to_hbm [thread:$0]  %s204, 128, %s4, [#allocation9]
    $region29: #{tpu_custom_call.1} parent=1 // pred_fallthru
      _
    // Predicated region
    $region30: #{tpu_custom_call.1} parent=1 // pred_check
      _
    $region31: #{tpu_custom_call.1} parent=1 // pred_check_branch
      %208 = sbr.rel (0) target = $region33
    $region32: #{tpu_custom_call.1} parent=1 // pred_region
      %s210 = ssub.s32 128, 128
      %211 = vsyncadd [#allocation9], %s210
      %s213 = sshll.u32 [#allocation10], 4
      %s214 = int_to_ptr.vmem [resolvable:$true] %s213
      %216 = dma.vmem_to_hbm [thread:$0]  %s214, 128, %s5, [#allocation9]
    $region33: #{tpu_custom_call.1} parent=1 // pred_fallthru
      _
    // Predicated region
    $region34: #{tpu_custom_call.1} parent=1 // pred_check
      _
    $region35: #{tpu_custom_call.1} parent=1 // pred_check_branch
      %218 = sbr.rel (0) target = $region37
    $region36: #{tpu_custom_call.1} parent=1 // pred_region
      %219 = dma.done [#allocation4], 128
    $region37: #{tpu_custom_call.1} parent=1 // pred_fallthru
      _
    // Predicated region
    $region38: #{tpu_custom_call.1} parent=1 // pred_check
      _
    $region39: #{tpu_custom_call.1} parent=1 // pred_check_branch
      %221 = sbr.rel (0) target = $region41
    $region40: #{tpu_custom_call.1} parent=1 // pred_region
      %222 = dma.done [#allocation9], 128
    $region41: #{tpu_custom_call.1} parent=1 // pred_fallthru
      _
    // Predicated region
    $region42: #{tpu_custom_call.1} parent=1 // pred_check
      _
    $region43: #{tpu_custom_call.1} parent=1 // pred_check_branch
      %224 = sbr.rel (0) target = $region45
    $region44: #{tpu_custom_call.1} parent=1 // pred_region
      %225 = dma.done [#allocation9], 128
    $region45: #{tpu_custom_call.1} parent=1 // pred_fallthru
      _
    %226 = vsyncpa [#allocation3], 1
    %227 = vsyncpa [#allocation6], 1
    %228 = vsyncpa [#allocation4], 1
    %229 = vsyncpa [#allocation9], 1

</llo_original>
